<compile_context>
chip_gen: v7x
topology: tpu7x:2x2x1
jax: 0.10.0
libtpu: 0.0.40
codegen_flags: <defaults>
</compile_context>

<pallas_src>
import functools

import jax
import jax.numpy as jnp
from jax.experimental import pallas as pl
from jax.experimental.pallas import tpu as pltpu


def _building_block_kernel(x_ref, t1_ref, t2_ref, g1_ref, b1_ref, g2_ref, b2_ref,
                           o_ref, lhs_ref, *, n_img, h_img, w_img, c_ch):
    """
    x_ref    : (N*H, W*C)     lane-dense input (also the residual)
    t*_ref   : (3*W*C, W*C)   fused block-Toeplitz conv weights (kh windows stacked on K)
    g*/b*_ref: (1, W*C)       batchnorm affine params, pre-tiled across W
    o_ref    : (N*H, W*C)     output
    lhs_ref  : (N*H, 3*W*C)   VMEM scratch: three vertically shifted kh windows,
                              each lane-aligned at lane offset kh*W*C
    """
    NH, WC = x_ref.shape
    eps = 1e-5
    inv_cnt = 1.0 / float(n_img * h_img * w_img)

    # Zero the whole window scratch once (full-vreg unmasked stores). The rows
    # implementing the vertical zero padding are never written afterwards, so
    # both convs share them.
    lhs_ref[...] = jnp.zeros_like(lhs_ref)

    def load_windows(act):
        # act: (N*H, W*C). Window kh lives at lanes [kh*WC, (kh+1)*WC);
        # output row h of the conv reads act row h + kh - 1 (zero when out of range).
        lhs_ref[:, WC:2 * WC] = act                       # kh=1: unshifted, full store
        for n in range(n_img):                            # kh=0 / kh=2: per-image row shift
            r0 = n * h_img
            lhs_ref[r0 + 1:r0 + h_img, 0:WC] = act[r0:r0 + h_img - 1, :]           # kh=0
            lhs_ref[r0:r0 + h_img - 1, 2 * WC:3 * WC] = act[r0 + 1:r0 + h_img, :]  # kh=2

    def conv(t_ref):
        # one fused matmul per conv: (NH, 3*WC) @ (3*WC, WC) -> (NH, WC)
        return jnp.dot(lhs_ref[...], t_ref[...], preferred_element_type=jnp.float32)

    def bn(acc, g_ref, b_ref):
        # single-pass batch stats (PyTorch training-mode semantics: biased var);
        # channel reduction over the W lane-groups via a log2(W) roll-and-add
        # tree (XLU slot) which also leaves the sums broadcast across all lanes.
        s = jnp.sum(acc, axis=0, keepdims=True)           # (1, WC)
        ssq = jnp.sum(acc * acc, axis=0, keepdims=True)   # (1, WC)
        stats = jnp.concatenate([s, ssq], axis=0)         # (2, WC)
        shift = c_ch
        while shift < WC:
            stats = stats + pltpu.roll(stats, shift, axis=1)
            shift *= 2
        mu = stats[0:1] * inv_cnt                         # per-channel mean, lane-broadcast
        var = jnp.maximum(stats[1:2] * inv_cnt - mu * mu, 0.0)
        scale = g_ref[...] * jax.lax.rsqrt(var + eps)     # (1, WC)
        offs = b_ref[...] - mu * scale                    # (1, WC)
        return acc * scale + offs

    # ---- conv1 -> bn1 -> relu1 ----
    load_windows(x_ref[...])
    y1 = jnp.maximum(bn(conv(t1_ref), g1_ref, b1_ref), 0.0)

    # ---- conv2 -> bn2 -> +identity -> relu2 ----
    load_windows(y1)
    o_ref[...] = jnp.maximum(bn(conv(t2_ref), g2_ref, b2_ref) + x_ref[...], 0.0)


def _toeplitz_weights(wt, W):
    """HWIO (3,3,Cin,Cout) -> (3*W*Cin, W*Cout) fused block-Toeplitz matrix.

    Row (kh, u, ci) x col (w, co) holds wt[kh, u-w+1, ci, co] when |u-w| <= 1
    (stride=1, padding=1). The width zero-padding is absorbed into the band
    structure, so the activations need no halo lanes.
    """
    KH, KW, Cin, Cout = wt.shape
    u = jnp.arange(W)
    w = jnp.arange(W)
    k = jnp.arange(KW)
    D = (u[None, :, None] == (w[None, None, :] + k[:, None, None] - 1)).astype(wt.dtype)
    t = jnp.einsum('kuw,hkio->huiwo', D, wt)              # (KH, W, Cin, W, Cout)
    return t.reshape(KH * W * Cin, W * Cout)


def building_block(x, w1, g1, b1, w2, g2, b2):
    """x: (N, H, W, C) f32 NHWC; w*: (3,3,C,C) HWIO; bn params (C,)."""
    N, H, W, C = x.shape
    WC = W * C
    assert w1.shape == (3, 3, C, C) and w2.shape == (3, 3, C, C)
    assert WC % 128 == 0, "lane-dense layout wants W*C to be a lane multiple"
    assert W & (W - 1) == 0, "roll-tree BN reduction assumes power-of-two W"

    x2d = x.reshape(N * H, WC)                            # lane-dense view (free reshape)
    t1 = _toeplitz_weights(w1, W)
    t2 = _toeplitz_weights(w2, W)
    tile = lambda v: jnp.tile(v.astype(jnp.float32), W).reshape(1, WC)

    kernel = functools.partial(_building_block_kernel,
                               n_img=N, h_img=H, w_img=W, c_ch=C)
    vmem = pl.BlockSpec(memory_space=pltpu.MemorySpace.VMEM)
    out2d = pl.pallas_call(
        kernel,
        out_shape=jax.ShapeDtypeStruct((N * H, WC), jnp.float32),
        in_specs=[vmem] * 7,
        out_specs=vmem,
        scratch_shapes=[pltpu.VMEM((N * H, 3 * WC), jnp.float32)],
        input_output_aliases={0: 0},                      # reuse x2d's HBM buffer for out
        compiler_params=pltpu.CompilerParams(vmem_limit_bytes=32 * 1024 * 1024),
    )(x2d, t1, t2, tile(g1), tile(b1), tile(g2), tile(b2))
    return out2d.reshape(N, H, W, C)


def ref_forward(x, w1, g1, b1, w2, g2, b2):
    """Pure-JAX reference (NHWC / HWIO), PyTorch training-mode forward semantics."""
    eps = 1e-5
    dn = jax.lax.conv_dimension_numbers(x.shape, w1.shape, ("NHWC", "HWIO", "NHWC"))

    def conv(a, w):
        return jax.lax.conv_general_dilated(a, w, (1, 1), "SAME",
                                            dimension_numbers=dn)

    def bn(a, g, b):
        mu = a.mean(axis=(0, 1, 2))
        var = a.var(axis=(0, 1, 2))  # biased, like PyTorch training-mode normalization
        return (a - mu) * jax.lax.rsqrt(var + eps) * g + b

    y = jnp.maximum(bn(conv(x, w1), g1, b1), 0.0)
    z = bn(conv(y, w2), g2, b2) + x
    return jnp.maximum(z, 0.0)


if __name__ == "__main__":
    key = jax.random.PRNGKey(0)
    # in_channels == out_channels (required by the residual add); W*C = 128 lanes.
    N, C, H, W = 2, 8, 16, 16
    k_x, k_w1, k_w2 = jax.random.split(key, 3)

    x = jax.random.normal(k_x, (N, H, W, C), jnp.float32)
    w1 = jax.random.normal(k_w1, (3, 3, C, C), jnp.float32) * 0.1
    w2 = jax.random.normal(k_w2, (3, 3, C, C), jnp.float32) * 0.1
    g1 = jnp.ones((C,), jnp.float32)
    b1 = jnp.zeros((C,), jnp.float32)
    g2 = jnp.ones((C,), jnp.float32)
    b2 = jnp.zeros((C,), jnp.float32)

    out = jax.jit(building_block)(x, w1, g1, b1, w2, g2, b2)
    jax.block_until_ready(out)

    ref = ref_forward(x, w1, g1, b1, w2, g2, b2)
    max_err = float(jnp.max(jnp.abs(out - ref)))
    assert jnp.allclose(out, ref, atol=1e-3, rtol=1e-3), f"max_err={max_err}"
    print("KERNEL_OK")
</pallas_src>

<mosaic_0001>
module attributes {stable_mosaic.version = 11 : i64} {
  func.func @_building_block_kernel(%arg0: memref<32x128xf32, #tpu.memory_space<vmem>>, %arg1: memref<384x128xf32, #tpu.memory_space<vmem>>, %arg2: memref<384x128xf32, #tpu.memory_space<vmem>>, %arg3: memref<1x128xf32, #tpu.memory_space<vmem>>, %arg4: memref<1x128xf32, #tpu.memory_space<vmem>>, %arg5: memref<1x128xf32, #tpu.memory_space<vmem>>, %arg6: memref<1x128xf32, #tpu.memory_space<vmem>>, %arg7: memref<32x128xf32, #tpu.memory_space<vmem>>, %arg8: memref<32x384xf32, #tpu.memory_space<vmem>>) attributes {dimension_semantics = [], scalar_prefetch = 0 : i64, scratch_operands = 1 : i64, tpu.core_type = #tpu.core_type<tc>} {
    %cst = arith.constant 0.000000e+00 : f32
    %0 = vector.broadcast %cst : f32 to vector<32x384xf32>
    %c0 = arith.constant 0 : index
    %c0_0 = arith.constant 0 : index
    %1 = vector.load %arg8[%c0, %c0_0] : memref<32x384xf32, #tpu.memory_space<vmem>>, vector<32x384xf32>
    tpu.vector_store %arg8[%c0, %c0_0], %0 {strides = array<i32>} : memref<32x384xf32, #tpu.memory_space<vmem>>, vector<32x384xf32>,
    %c0_1 = arith.constant 0 : index
    %c0_2 = arith.constant 0 : index
    %2 = vector.load %arg0[%c0_1, %c0_2] : memref<32x128xf32, #tpu.memory_space<vmem>>, vector<32x128xf32>
    %c0_3 = arith.constant 0 : index
    %c128 = arith.constant 128 : index
    %3 = vector.load %arg8[%c0_3, %c128] : memref<32x384xf32, #tpu.memory_space<vmem>>, vector<32x128xf32>
    tpu.vector_store %arg8[%c0_3, %c128], %2 {strides = array<i32>} : memref<32x384xf32, #tpu.memory_space<vmem>>, vector<32x128xf32>,
    %4 = vector.extract_strided_slice %2 {offsets = [0, 0], sizes = [15, 128], strides = [1, 1]} : vector<32x128xf32> to vector<15x128xf32>
    %c1 = arith.constant 1 : index
    %c0_4 = arith.constant 0 : index
    %5 = vector.load %arg8[%c1, %c0_4] : memref<32x384xf32, #tpu.memory_space<vmem>>, vector<15x128xf32>
    tpu.vector_store %arg8[%c1, %c0_4], %4 {strides = array<i32>} : memref<32x384xf32, #tpu.memory_space<vmem>>, vector<15x128xf32>,
    %6 = vector.extract_strided_slice %2 {offsets = [1, 0], sizes = [15, 128], strides = [1, 1]} : vector<32x128xf32> to vector<15x128xf32>
    %c0_5 = arith.constant 0 : index
    %c256 = arith.constant 256 : index
    %7 = vector.load %arg8[%c0_5, %c256] : memref<32x384xf32, #tpu.memory_space<vmem>>, vector<15x128xf32>
    tpu.vector_store %arg8[%c0_5, %c256], %6 {strides = array<i32>} : memref<32x384xf32, #tpu.memory_space<vmem>>, vector<15x128xf32>,
    %8 = vector.extract_strided_slice %2 {offsets = [16, 0], sizes = [15, 128], strides = [1, 1]} : vector<32x128xf32> to vector<15x128xf32>
    %c17 = arith.constant 17 : index
    %c0_6 = arith.constant 0 : index
    %9 = vector.load %arg8[%c17, %c0_6] : memref<32x384xf32, #tpu.memory_space<vmem>>, vector<15x128xf32>
    tpu.vector_store %arg8[%c17, %c0_6], %8 {strides = array<i32>} : memref<32x384xf32, #tpu.memory_space<vmem>>, vector<15x128xf32>,
    %10 = vector.extract_strided_slice %2 {offsets = [17, 0], sizes = [15, 128], strides = [1, 1]} : vector<32x128xf32> to vector<15x128xf32>
    %c16 = arith.constant 16 : index
    %c256_7 = arith.constant 256 : index
    %11 = vector.load %arg8[%c16, %c256_7] : memref<32x384xf32, #tpu.memory_space<vmem>>, vector<15x128xf32>
    tpu.vector_store %arg8[%c16, %c256_7], %10 {strides = array<i32>} : memref<32x384xf32, #tpu.memory_space<vmem>>, vector<15x128xf32>,
    %c0_8 = arith.constant 0 : index
    %c0_9 = arith.constant 0 : index
    %12 = vector.load %arg8[%c0_8, %c0_9] : memref<32x384xf32, #tpu.memory_space<vmem>>, vector<32x384xf32>
    %c0_10 = arith.constant 0 : index
    %c0_11 = arith.constant 0 : index
    %13 = vector.load %arg1[%c0_10, %c0_11] : memref<384x128xf32, #tpu.memory_space<vmem>>, vector<384x128xf32>
    %cst_12 = arith.constant dense<0.000000e+00> : vector<32x128xf32>
    %14 = tpu.matmul %12, %13, %cst_12 {dimension_numbers = #tpu.dot_dimension_numbers<[1], [0], [0], [1], [0, 0, 1, 1], [], []>} : vector<32x384xf32>, vector<384x128xf32>, vector<32x128xf32> -> vector<32x128xf32>
    %cst_13 = arith.constant dense<0.000000e+00> : vector<128xf32>
    %15 = vector.multi_reduction <add>, %14, %cst_13 [0] : vector<32x128xf32> to vector<128xf32>
    %16 = vector.shape_cast %15 : vector<128xf32> to vector<1x128xf32>
    %17 = arith.mulf %14, %14 : vector<32x128xf32>
    %cst_14 = arith.constant dense<0.000000e+00> : vector<128xf32>
    %18 = vector.multi_reduction <add>, %17, %cst_14 [0] : vector<32x128xf32> to vector<128xf32>
    %19 = vector.shape_cast %18 : vector<128xf32> to vector<1x128xf32>
    %20 = tpu.concatenate %16, %19 in 0 : vector<1x128xf32>, vector<1x128xf32> -> vector<2x128xf32>
    %c8_i32 = arith.constant 8 : i32
    %21 = tpu.dynamic_rotate %20 by %c8_i32 dim 1 : vector<2x128xf32>, i32 -> vector<2x128xf32>
    %22 = arith.addf %20, %21 : vector<2x128xf32>
    %c16_i32 = arith.constant 16 : i32
    %23 = tpu.dynamic_rotate %22 by %c16_i32 dim 1 : vector<2x128xf32>, i32 -> vector<2x128xf32>
    %24 = arith.addf %22, %23 : vector<2x128xf32>
    %c32_i32 = arith.constant 32 : i32
    %25 = tpu.dynamic_rotate %24 by %c32_i32 dim 1 : vector<2x128xf32>, i32 -> vector<2x128xf32>
    %26 = arith.addf %24, %25 : vector<2x128xf32>
    %c64_i32 = arith.constant 64 : i32
    %27 = tpu.dynamic_rotate %26 by %c64_i32 dim 1 : vector<2x128xf32>, i32 -> vector<2x128xf32>
    %28 = arith.addf %26, %27 : vector<2x128xf32>
    %29 = vector.extract_strided_slice %28 {offsets = [0, 0], sizes = [1, 128], strides = [1, 1]} : vector<2x128xf32> to vector<1x128xf32>
    %cst_15 = arith.constant 0.001953125 : f32
    %30 = vector.broadcast %cst_15 : f32 to vector<1x128xf32>
    %31 = arith.mulf %29, %30 : vector<1x128xf32>
    %32 = vector.extract_strided_slice %28 {offsets = [1, 0], sizes = [1, 128], strides = [1, 1]} : vector<2x128xf32> to vector<1x128xf32>
    %cst_16 = arith.constant 0.001953125 : f32
    %33 = vector.broadcast %cst_16 : f32 to vector<1x128xf32>
    %34 = arith.mulf %32, %33 : vector<1x128xf32>
    %35 = arith.mulf %31, %31 : vector<1x128xf32>
    %36 = arith.subf %34, %35 : vector<1x128xf32>
    %cst_17 = arith.constant 0.000000e+00 : f32
    %37 = vector.broadcast %cst_17 : f32 to vector<1x128xf32>
    %38 = arith.maximumf %36, %37 : vector<1x128xf32>
    %c0_18 = arith.constant 0 : index
    %c0_19 = arith.constant 0 : index
    %39 = vector.load %arg3[%c0_18, %c0_19] : memref<1x128xf32, #tpu.memory_space<vmem>>, vector<1x128xf32>
    %cst_20 = arith.constant 9.99999974E-6 : f32
    %40 = vector.broadcast %cst_20 : f32 to vector<1x128xf32>
    %41 = arith.addf %38, %40 : vector<1x128xf32>
    %42 = math.rsqrt %41 : vector<1x128xf32>
    %43 = arith.mulf %39, %42 : vector<1x128xf32>
    %c0_21 = arith.constant 0 : index
    %c0_22 = arith.constant 0 : index
    %44 = vector.load %arg4[%c0_21, %c0_22] : memref<1x128xf32, #tpu.memory_space<vmem>>, vector<1x128xf32>
    %45 = arith.mulf %31, %43 : vector<1x128xf32>
    %46 = arith.subf %44, %45 : vector<1x128xf32>
    %47 = vector.broadcast %43 : vector<1x128xf32> to vector<32x128xf32>
    %48 = arith.mulf %14, %47 : vector<32x128xf32>
    %49 = vector.broadcast %46 : vector<1x128xf32> to vector<32x128xf32>
    %50 = arith.addf %48, %49 : vector<32x128xf32>
    %cst_23 = arith.constant 0.000000e+00 : f32
    %51 = vector.broadcast %cst_23 : f32 to vector<32x128xf32>
    %52 = arith.maximumf %50, %51 : vector<32x128xf32>
    %c0_24 = arith.constant 0 : index
    %c128_25 = arith.constant 128 : index
    %53 = vector.load %arg8[%c0_24, %c128_25] : memref<32x384xf32, #tpu.memory_space<vmem>>, vector<32x128xf32>
    tpu.vector_store %arg8[%c0_24, %c128_25], %52 {strides = array<i32>} : memref<32x384xf32, #tpu.memory_space<vmem>>, vector<32x128xf32>,
    %54 = vector.extract_strided_slice %52 {offsets = [0, 0], sizes = [15, 128], strides = [1, 1]} : vector<32x128xf32> to vector<15x128xf32>
    %c1_26 = arith.constant 1 : index
    %c0_27 = arith.constant 0 : index
    %55 = vector.load %arg8[%c1_26, %c0_27] : memref<32x384xf32, #tpu.memory_space<vmem>>, vector<15x128xf32>
    tpu.vector_store %arg8[%c1_26, %c0_27], %54 {strides = array<i32>} : memref<32x384xf32, #tpu.memory_space<vmem>>, vector<15x128xf32>,
    %56 = vector.extract_strided_slice %52 {offsets = [1, 0], sizes = [15, 128], strides = [1, 1]} : vector<32x128xf32> to vector<15x128xf32>
    %c0_28 = arith.constant 0 : index
    %c256_29 = arith.constant 256 : index
    %57 = vector.load %arg8[%c0_28, %c256_29] : memref<32x384xf32, #tpu.memory_space<vmem>>, vector<15x128xf32>
    tpu.vector_store %arg8[%c0_28, %c256_29], %56 {strides = array<i32>} : memref<32x384xf32, #tpu.memory_space<vmem>>, vector<15x128xf32>,
    %58 = vector.extract_strided_slice %52 {offsets = [16, 0], sizes = [15, 128], strides = [1, 1]} : vector<32x128xf32> to vector<15x128xf32>
    %c17_30 = arith.constant 17 : index
    %c0_31 = arith.constant 0 : index
    %59 = vector.load %arg8[%c17_30, %c0_31] : memref<32x384xf32, #tpu.memory_space<vmem>>, vector<15x128xf32>
    tpu.vector_store %arg8[%c17_30, %c0_31], %58 {strides = array<i32>} : memref<32x384xf32, #tpu.memory_space<vmem>>, vector<15x128xf32>,
    %60 = vector.extract_strided_slice %52 {offsets = [17, 0], sizes = [15, 128], strides = [1, 1]} : vector<32x128xf32> to vector<15x128xf32>
    %c16_32 = arith.constant 16 : index
    %c256_33 = arith.constant 256 : index
    %61 = vector.load %arg8[%c16_32, %c256_33] : memref<32x384xf32, #tpu.memory_space<vmem>>, vector<15x128xf32>
    tpu.vector_store %arg8[%c16_32, %c256_33], %60 {strides = array<i32>} : memref<32x384xf32, #tpu.memory_space<vmem>>, vector<15x128xf32>,
    %c0_34 = arith.constant 0 : index
    %c0_35 = arith.constant 0 : index
    %62 = vector.load %arg8[%c0_34, %c0_35] : memref<32x384xf32, #tpu.memory_space<vmem>>, vector<32x384xf32>
    %c0_36 = arith.constant 0 : index
    %c0_37 = arith.constant 0 : index
    %63 = vector.load %arg2[%c0_36, %c0_37] : memref<384x128xf32, #tpu.memory_space<vmem>>, vector<384x128xf32>
    %cst_38 = arith.constant dense<0.000000e+00> : vector<32x128xf32>
    %64 = tpu.matmul %62, %63, %cst_38 {dimension_numbers = #tpu.dot_dimension_numbers<[1], [0], [0], [1], [0, 0, 1, 1], [], []>} : vector<32x384xf32>, vector<384x128xf32>, vector<32x128xf32> -> vector<32x128xf32>
    %cst_39 = arith.constant dense<0.000000e+00> : vector<128xf32>
    %65 = vector.multi_reduction <add>, %64, %cst_39 [0] : vector<32x128xf32> to vector<128xf32>
    %66 = vector.shape_cast %65 : vector<128xf32> to vector<1x128xf32>
    %67 = arith.mulf %64, %64 : vector<32x128xf32>
    %cst_40 = arith.constant dense<0.000000e+00> : vector<128xf32>
    %68 = vector.multi_reduction <add>, %67, %cst_40 [0] : vector<32x128xf32> to vector<128xf32>
    %69 = vector.shape_cast %68 : vector<128xf32> to vector<1x128xf32>
    %70 = tpu.concatenate %66, %69 in 0 : vector<1x128xf32>, vector<1x128xf32> -> vector<2x128xf32>
    %c8_i32_41 = arith.constant 8 : i32
    %71 = tpu.dynamic_rotate %70 by %c8_i32_41 dim 1 : vector<2x128xf32>, i32 -> vector<2x128xf32>
    %72 = arith.addf %70, %71 : vector<2x128xf32>
    %c16_i32_42 = arith.constant 16 : i32
    %73 = tpu.dynamic_rotate %72 by %c16_i32_42 dim 1 : vector<2x128xf32>, i32 -> vector<2x128xf32>
    %74 = arith.addf %72, %73 : vector<2x128xf32>
    %c32_i32_43 = arith.constant 32 : i32
    %75 = tpu.dynamic_rotate %74 by %c32_i32_43 dim 1 : vector<2x128xf32>, i32 -> vector<2x128xf32>
    %76 = arith.addf %74, %75 : vector<2x128xf32>
    %c64_i32_44 = arith.constant 64 : i32
    %77 = tpu.dynamic_rotate %76 by %c64_i32_44 dim 1 : vector<2x128xf32>, i32 -> vector<2x128xf32>
    %78 = arith.addf %76, %77 : vector<2x128xf32>
    %79 = vector.extract_strided_slice %78 {offsets = [0, 0], sizes = [1, 128], strides = [1, 1]} : vector<2x128xf32> to vector<1x128xf32>
    %cst_45 = arith.constant 0.001953125 : f32
    %80 = vector.broadcast %cst_45 : f32 to vector<1x128xf32>
    %81 = arith.mulf %79, %80 : vector<1x128xf32>
    %82 = vector.extract_strided_slice %78 {offsets = [1, 0], sizes = [1, 128], strides = [1, 1]} : vector<2x128xf32> to vector<1x128xf32>
    %cst_46 = arith.constant 0.001953125 : f32
    %83 = vector.broadcast %cst_46 : f32 to vector<1x128xf32>
    %84 = arith.mulf %82, %83 : vector<1x128xf32>
    %85 = arith.mulf %81, %81 : vector<1x128xf32>
    %86 = arith.subf %84, %85 : vector<1x128xf32>
    %cst_47 = arith.constant 0.000000e+00 : f32
    %87 = vector.broadcast %cst_47 : f32 to vector<1x128xf32>
    %88 = arith.maximumf %86, %87 : vector<1x128xf32>
    %c0_48 = arith.constant 0 : index
    %c0_49 = arith.constant 0 : index
    %89 = vector.load %arg5[%c0_48, %c0_49] : memref<1x128xf32, #tpu.memory_space<vmem>>, vector<1x128xf32>
    %cst_50 = arith.constant 9.99999974E-6 : f32
    %90 = vector.broadcast %cst_50 : f32 to vector<1x128xf32>
    %91 = arith.addf %88, %90 : vector<1x128xf32>
    %92 = math.rsqrt %91 : vector<1x128xf32>
    %93 = arith.mulf %89, %92 : vector<1x128xf32>
    %c0_51 = arith.constant 0 : index
    %c0_52 = arith.constant 0 : index
    %94 = vector.load %arg6[%c0_51, %c0_52] : memref<1x128xf32, #tpu.memory_space<vmem>>, vector<1x128xf32>
    %95 = arith.mulf %81, %93 : vector<1x128xf32>
    %96 = arith.subf %94, %95 : vector<1x128xf32>
    %97 = vector.broadcast %93 : vector<1x128xf32> to vector<32x128xf32>
    %98 = arith.mulf %64, %97 : vector<32x128xf32>
    %99 = vector.broadcast %96 : vector<1x128xf32> to vector<32x128xf32>
    %100 = arith.addf %98, %99 : vector<32x128xf32>
    %c0_53 = arith.constant 0 : index
    %c0_54 = arith.constant 0 : index
    %101 = vector.load %arg0[%c0_53, %c0_54] : memref<32x128xf32, #tpu.memory_space<vmem>>, vector<32x128xf32>
    %102 = arith.addf %100, %101 : vector<32x128xf32>
    %cst_55 = arith.constant 0.000000e+00 : f32
    %103 = vector.broadcast %cst_55 : f32 to vector<32x128xf32>
    %104 = arith.maximumf %102, %103 : vector<32x128xf32>
    %c0_56 = arith.constant 0 : index
    %c0_57 = arith.constant 0 : index
    %105 = vector.load %arg7[%c0_56, %c0_57] : memref<32x128xf32, #tpu.memory_space<vmem>>, vector<32x128xf32>
    tpu.vector_store %arg7[%c0_56, %c0_57], %104 {strides = array<i32>} : memref<32x128xf32, #tpu.memory_space<vmem>>, vector<32x128xf32>,
    return
  }
}

</mosaic_0001>

<llo_original>
// kernel: tile.23
$region0: #{tile.23}
  #allocation0 [shape = 's32[1]{0}', space=sflag, size = 0x4, scoped, tag = 'scoped memory for tile.23']
  %s0 = inlined_call_operand.vmem [shape: f32[8], index: 0, kind: input, shape index: {}]
  %s1 = inlined_call_operand.vmem [shape: f32[16,8], index: 1, kind: output, shape index: {}]
  // Predicated region
  $region2: #{tile.23} parent=0 // pred_check
    _
  $region3: #{tile.23} parent=0 // pred_check_branch
    %3 = sbr.rel (0) target = $region5
  $region4: #{tile.23} parent=0 // pred_region
    _
  $region5: #{tile.23} parent=0 // pred_fallthru
    _
  %v4 = vld [vmem:[%s0] ss:$0 sm:$0xff]
  %5 = vst [vmem:[%s1] sm:$0xff] %v4
  %s6 = scalar_lea.vmem %s1, 8
  %7 = vst [vmem:[%s6] sm:$0xff] %v4

// kernel: tile.24
$region0: #{tile.24}
  %s0 = inlined_call_operand.vmem [shape: f32[16,8], index: 0, kind: input, shape index: {}]
  %s1 = inlined_call_operand.vmem [shape: f32[1,128], index: 1, kind: output, shape index: {}]
  $region1: #{tile.24} parent=0
    #allocation0 [shape = 'u8[4096]{0}', space=vmem, size = 0x1000, scoped, tag = 'scoped mem for output reshape']
    %v2 = vld [vmem:[%s0] sm:$0x1]
    %vm3 = vcmask 64512
    %4 = vst.msk [vmem:[#allocation0] sm:$0x1] %vm3, %v2
    %s5 = scalar_lea.vmem %s0, 15
    %v6 = vld [vmem:[%s5] sm:$0x1]
    %7 = vrot.lane.b32.xlu0 %v6, 120
    %v8 = vpop.permute.xlu0 %7
    %vm9 = vcmask 1048512
    %10 = vst.msk [vmem:[#allocation0] sm:$0x1] %vm9, %v8
    %s11 = scalar_lea.vmem %s0, 14
    %v12 = vld [vmem:[%s11] sm:$0x1]
    %13 = vrot.lane.b32.xlu0 %v12, 112
    %v14 = vpop.permute.xlu0 %13
    %vm15 = vcmask 982912
    %16 = vst.msk [vmem:[#allocation0] sm:$0x1] %vm15, %v14
    %s17 = scalar_lea.vmem %s0, 13
    %v18 = vld [vmem:[%s17] sm:$0x1]
    %19 = vrot.lane.b32.xlu0 %v18, 104
    %v20 = vpop.permute.xlu0 %19
    %vm21 = vcmask 917312
    %22 = vst.msk [vmem:[#allocation0] sm:$0x1] %vm21, %v20
    %s23 = scalar_lea.vmem %s0, 12
    %v24 = vld [vmem:[%s23] sm:$0x1]
    %25 = vrot.lane.b32.xlu0 %v24, 96
    %v26 = vpop.permute.xlu0 %25
    %vm27 = vcmask 851712
    %28 = vst.msk [vmem:[#allocation0] sm:$0x1] %vm27, %v26
    %s29 = scalar_lea.vmem %s0, 11
    %v30 = vld [vmem:[%s29] sm:$0x1]
    %31 = vrot.lane.b32.xlu0 %v30, 88
    %v32 = vpop.permute.xlu0 %31
    %vm33 = vcmask 786112
    %34 = vst.msk [vmem:[#allocation0] sm:$0x1] %vm33, %v32
    %s35 = scalar_lea.vmem %s0, 10
    %v36 = vld [vmem:[%s35] sm:$0x1]
    %37 = vrot.lane.b32.xlu0 %v36, 80
    %v38 = vpop.permute.xlu0 %37
    %vm39 = vcmask 720512
    %40 = vst.msk [vmem:[#allocation0] sm:$0x1] %vm39, %v38
    %s41 = scalar_lea.vmem %s0, 9
    %v42 = vld [vmem:[%s41] sm:$0x1]
    %43 = vrot.lane.b32.xlu0 %v42, 72
    %v44 = vpop.permute.xlu0 %43
    %vm45 = vcmask 654912
    %46 = vst.msk [vmem:[#allocation0] sm:$0x1] %vm45, %v44
    %s47 = scalar_lea.vmem %s0, 8
    %v48 = vld [vmem:[%s47] sm:$0x1]
    %49 = vrot.lane.b32.xlu0 %v48, 64
    %v50 = vpop.permute.xlu0 %49
    %vm51 = vcmask 589312
    %52 = vst.msk [vmem:[#allocation0] sm:$0x1] %vm51, %v50
    %s53 = scalar_lea.vmem %s0, 7
    %v54 = vld [vmem:[%s53] sm:$0x1]
    %55 = vrot.lane.b32.xlu0 %v54, 56
    %v56 = vpop.permute.xlu0 %55
    %vm57 = vcmask 523712
    %58 = vst.msk [vmem:[#allocation0] sm:$0x1] %vm57, %v56
    %s59 = scalar_lea.vmem %s0, 6
    %v60 = vld [vmem:[%s59] sm:$0x1]
    %61 = vrot.lane.b32.xlu0 %v60, 48
    %v62 = vpop.permute.xlu0 %61
    %vm63 = vcmask 458112
    %64 = vst.msk [vmem:[#allocation0] sm:$0x1] %vm63, %v62
    %s65 = scalar_lea.vmem %s0, 5
    %v66 = vld [vmem:[%s65] sm:$0x1]
    %67 = vrot.lane.b32.xlu0 %v66, 40
    %v68 = vpop.permute.xlu0 %67
    %vm69 = vcmask 392512
    %70 = vst.msk [vmem:[#allocation0] sm:$0x1] %vm69, %v68
    %s71 = scalar_lea.vmem %s0, 4
    %v72 = vld [vmem:[%s71] sm:$0x1]
    %73 = vrot.lane.b32.xlu0 %v72, 32
    %v74 = vpop.permute.xlu0 %73
    %vm75 = vcmask 326912
    %76 = vst.msk [vmem:[#allocation0] sm:$0x1] %vm75, %v74
    %s77 = scalar_lea.vmem %s0, 3
    %v78 = vld [vmem:[%s77] sm:$0x1]
    %79 = vrot.lane.b32.xlu0 %v78, 24
    %v80 = vpop.permute.xlu0 %79
    %vm81 = vcmask 261312
    %82 = vst.msk [vmem:[#allocation0] sm:$0x1] %vm81, %v80
    %s83 = scalar_lea.vmem %s0, 2
    %v84 = vld [vmem:[%s83] sm:$0x1]
    %85 = vrot.lane.b32.xlu0 %v84, 16
    %v86 = vpop.permute.xlu0 %85
    %vm87 = vcmask 195712
    %88 = vst.msk [vmem:[#allocation0] sm:$0x1] %vm87, %v86
    %s89 = scalar_lea.vmem %s0, 1
    %v90 = vld [vmem:[%s89] sm:$0x1]
    %91 = vrot.lane.b32.xlu0 %v90, 8
    %v92 = vpop.permute.xlu0 %91
    %vm93 = vcmask 130112
    %94 = vst.msk [vmem:[#allocation0] sm:$0x1] %vm93, %v92
    %s96 = sshllo.u32 0, 1
    %v98 = vld [vmem:[#allocation0] sm:%s96]
    %s99 = sshllo.u32 0, 1
    %100 = vst [vmem:[%s1] sm:%s99] %v98

// kernel: building_block.1
$region0: #{building_block.1}
  #allocation0 [shape = 'u32[]', space=smem, size = 0x4, offset = 0x4, fixed_abs, tag = 'smem constant byte address 0x4 - core index']
  #allocation1 [shape = 'u32[144,128]{1,0:T(1,128)}', space=vmem, size = 0x12000, scoped, tag = 'internal scratch']
  #allocation2 [shape = 'f32[32,384]{1,0:T(8,128)}', space=vmem, size = 0xc000, scoped, tag = 'scratch operand']
  %s0 = inlined_call_operand.vmem [shape: f32[32,128], index: 0, kind: input, shape index: {}, may-alias: {0,7}]
  %s1 = inlined_call_operand.vmem [shape: f32[384,128], index: 1, kind: input, shape index: {}]
  %s2 = inlined_call_operand.vmem [shape: f32[384,128], index: 2, kind: input, shape index: {}]
  %s3 = inlined_call_operand.vmem [shape: f32[1,128], index: 3, kind: input, shape index: {}]
  %s4 = inlined_call_operand.vmem [shape: f32[1,128], index: 4, kind: input, shape index: {}]
  %s5 = inlined_call_operand.vmem [shape: f32[1,128], index: 5, kind: input, shape index: {}]
  %s6 = inlined_call_operand.vmem [shape: f32[1,128], index: 6, kind: input, shape index: {}]
  %s7 = inlined_call_operand.vmem [shape: f32[32,128], index: 7, kind: output, shape index: {}, may-alias: {0,7}]
  %s8 = sld [smem:[#allocation0]]
  $region38: #{building_block.1} parent=0
    _
  %s10 = ssub.s32 1, %s8
  %s11 = scalar_select 0, %s10, %s8
  // Predicated region
  $region2: #{building_block.1} parent=0 // pred_check
    _
  $region3: #{building_block.1} parent=0 // pred_check_branch
    %13 = sbr.rel (0) target = $region5
  $region4: #{building_block.1} parent=0 // pred_region
    _
  $region5: #{building_block.1} parent=0 // pred_fallthru
    _
  // Predicated region
  $region6: #{building_block.1} parent=0 // pred_check
    _
  $region7: #{building_block.1} parent=0 // pred_check_branch
    %15 = sbr.rel (0) target = $region9
  $region8: #{building_block.1} parent=0 // pred_region
    _
  $region9: #{building_block.1} parent=0 // pred_fallthru
    _
  // Predicated region
  $region10: #{building_block.1} parent=0 // pred_check
    _
  $region11: #{building_block.1} parent=0 // pred_check_branch
    %17 = sbr.rel (0) target = $region13
  $region12: #{building_block.1} parent=0 // pred_region
    _
  $region13: #{building_block.1} parent=0 // pred_fallthru
    _
  // Predicated region
  $region14: #{building_block.1} parent=0 // pred_check
    _
  $region15: #{building_block.1} parent=0 // pred_check_branch
    %19 = sbr.rel (0) target = $region17
  $region16: #{building_block.1} parent=0 // pred_region
    _
  $region17: #{building_block.1} parent=0 // pred_fallthru
    _
  // Predicated region
  $region18: #{building_block.1} parent=0 // pred_check
    _
  $region19: #{building_block.1} parent=0 // pred_check_branch
    %21 = sbr.rel (0) target = $region21
  $region20: #{building_block.1} parent=0 // pred_region
    _
  $region21: #{building_block.1} parent=0 // pred_fallthru
    _
  // Predicated region
  $region22: #{building_block.1} parent=0 // pred_check
    _
  $region23: #{building_block.1} parent=0 // pred_check_branch
    %23 = sbr.rel (0) target = $region25
  $region24: #{building_block.1} parent=0 // pred_region
    _
  $region25: #{building_block.1} parent=0 // pred_fallthru
    _
  // Predicated region
  $region26: #{building_block.1} parent=0 // pred_check
    _
  $region27: #{building_block.1} parent=0 // pred_check_branch
    %25 = sbr.rel (0) target = $region29
  $region28: #{building_block.1} parent=0 // pred_region
    _
  $region29: #{building_block.1} parent=0 // pred_fallthru
    _
  %26 = vst [vmem:[#allocation2] sm:$0xff] 0.0
  %27 = vst [vmem:[#allocation2 + $0x8] sm:$0xff] 0.0
  %28 = vst [vmem:[#allocation2 + $0x10] sm:$0xff] 0.0
  %29 = vst [vmem:[#allocation2 + $0x18] sm:$0xff] 0.0
  %30 = vst [vmem:[#allocation2 + $0x20] sm:$0xff] 0.0
  %31 = vst [vmem:[#allocation2 + $0x28] sm:$0xff] 0.0
  %32 = vst [vmem:[#allocation2 + $0x30] sm:$0xff] 0.0
  %33 = vst [vmem:[#allocation2 + $0x38] sm:$0xff] 0.0
  %34 = vst [vmem:[#allocation2 + $0x40] sm:$0xff] 0.0
  %35 = vst [vmem:[#allocation2 + $0x48] sm:$0xff] 0.0
  %36 = vst [vmem:[#allocation2 + $0x50] sm:$0xff] 0.0
  %37 = vst [vmem:[#allocation2 + $0x58] sm:$0xff] 0.0
  %v38 = vld [vmem:[%s0] sm:$0xff]
  %v39 = vld [vmem:[%s0 + $0x8] sm:$0xff]
  %v40 = vld [vmem:[%s0 + $0x10] sm:$0xff]
  %v41 = vld [vmem:[%s0 + $0x18] sm:$0xff]
  %42 = vst [vmem:[#allocation2 + $0x8] sm:$0xff] %v38
  %43 = vst [vmem:[#allocation2 + $0x20] sm:$0xff] %v39
  %44 = vst [vmem:[#allocation2 + $0x38] sm:$0xff] %v40
  %45 = vst [vmem:[#allocation2 + $0x50] sm:$0xff] %v41
  %vm48 = vcmask 1040384
  %v49 = vrot.slane %v38, 7
  %v50 = vrot.slane %v39, 7
  %v51 = vsel %vm48, %v49, %v50
  %54 = vst [vmem:[#allocation2] sm:$0xfe] %v49
  %55 = vst [vmem:[#allocation2 + $0x18] sm:$0xff] %v51
  %vm56 = vcmask 1046528
  %v57 = vrot.slane %v38, 1
  %v58 = vrot.slane %v39, 1
  %v59 = vsel %vm56, %v57, %v58
  %62 = vst [vmem:[#allocation2 + $0x10] sm:$0xff] %v59
  %63 = vst [vmem:[#allocation2 + $0x28] sm:$0x7f] %v58
  %v66 = vrot.slane %v40, 7
  %v67 = vrot.slane %v41, 7
  %v68 = vsel %vm48, %v66, %v67
  %71 = vst [vmem:[#allocation2 + $0x30] sm:$0xfe] %v66
  %72 = vst [vmem:[#allocation2 + $0x48] sm:$0xff] %v68
  %v73 = vrot.slane %v40, 1
  %v74 = vrot.slane %v41, 1
  %v75 = vsel %vm56, %v73, %v74
  %78 = vst [vmem:[#allocation2 + $0x40] sm:$0xff] %v75
  %79 = vst [vmem:[#allocation2 + $0x58] sm:$0x7f] %v74
  %v80 = vld [vmem:[#allocation2] sm:$0xff]
  %v81 = vld [vmem:[#allocation2 + $0x8] sm:$0xff]
  %v82 = vld [vmem:[#allocation2 + $0x10] sm:$0xff]
  %v83 = vld [vmem:[#allocation2 + $0x18] sm:$0xff]
  %v84 = vld [vmem:[#allocation2 + $0x20] sm:$0xff]
  %v85 = vld [vmem:[#allocation2 + $0x28] sm:$0xff]
  %v86 = vld [vmem:[#allocation2 + $0x30] sm:$0xff]
  %v87 = vld [vmem:[#allocation2 + $0x38] sm:$0xff]
  %v88 = vld [vmem:[#allocation2 + $0x40] sm:$0xff]
  %v89 = vld [vmem:[#allocation2 + $0x48] sm:$0xff]
  %v90 = vld [vmem:[#allocation2 + $0x50] sm:$0xff]
  %v91 = vld [vmem:[#allocation2 + $0x58] sm:$0xff]
  %v92 = vld [vmem:[%s1] sm:$0xff]
  %v93 = vld [vmem:[%s1 + $0x8] sm:$0xff]
  %v94 = vld [vmem:[%s1 + $0x10] sm:$0xff]
  %v95 = vld [vmem:[%s1 + $0x18] sm:$0xff]
  %v96 = vld [vmem:[%s1 + $0x20] sm:$0xff]
  %v97 = vld [vmem:[%s1 + $0x28] sm:$0xff]
  %v98 = vld [vmem:[%s1 + $0x30] sm:$0xff]
  %v99 = vld [vmem:[%s1 + $0x38] sm:$0xff]
  %v100 = vld [vmem:[%s1 + $0x40] sm:$0xff]
  %v101 = vld [vmem:[%s1 + $0x48] sm:$0xff]
  %v102 = vld [vmem:[%s1 + $0x50] sm:$0xff]
  %v103 = vld [vmem:[%s1 + $0x58] sm:$0xff]
  %v104 = vld [vmem:[%s1 + $0x60] sm:$0xff]
  %v105 = vld [vmem:[%s1 + $0x68] sm:$0xff]
  %v106 = vld [vmem:[%s1 + $0x70] sm:$0xff]
  %v107 = vld [vmem:[%s1 + $0x78] sm:$0xff]
  %v108 = vld [vmem:[%s1 + $0x80] sm:$0xff]
  %v109 = vld [vmem:[%s1 + $0x88] sm:$0xff]
  %v110 = vld [vmem:[%s1 + $0x90] sm:$0xff]
  %v111 = vld [vmem:[%s1 + $0x98] sm:$0xff]
  %v112 = vld [vmem:[%s1 + $0xa0] sm:$0xff]
  %v113 = vld [vmem:[%s1 + $0xa8] sm:$0xff]
  %v114 = vld [vmem:[%s1 + $0xb0] sm:$0xff]
  %v115 = vld [vmem:[%s1 + $0xb8] sm:$0xff]
  %v116 = vld [vmem:[%s1 + $0xc0] sm:$0xff]
  %v117 = vld [vmem:[%s1 + $0xc8] sm:$0xff]
  %v118 = vld [vmem:[%s1 + $0xd0] sm:$0xff]
  %v119 = vld [vmem:[%s1 + $0xd8] sm:$0xff]
  %v120 = vld [vmem:[%s1 + $0xe0] sm:$0xff]
  %v121 = vld [vmem:[%s1 + $0xe8] sm:$0xff]
  %v122 = vld [vmem:[%s1 + $0xf0] sm:$0xff]
  %v123 = vld [vmem:[%s1 + $0xf8] sm:$0xff]
  %v124 = vld [vmem:[%s1 + $0x100] sm:$0xff]
  %v125 = vld [vmem:[%s1 + $0x108] sm:$0xff]
  %v126 = vld [vmem:[%s1 + $0x110] sm:$0xff]
  %v127 = vld [vmem:[%s1 + $0x118] sm:$0xff]
  %v128 = vld [vmem:[%s1 + $0x120] sm:$0xff]
  %v129 = vld [vmem:[%s1 + $0x128] sm:$0xff]
  %v130 = vld [vmem:[%s1 + $0x130] sm:$0xff]
  %v131 = vld [vmem:[%s1 + $0x138] sm:$0xff]
  %v132 = vld [vmem:[%s1 + $0x140] sm:$0xff]
  %v133 = vld [vmem:[%s1 + $0x148] sm:$0xff]
  %v134 = vld [vmem:[%s1 + $0x150] sm:$0xff]
  %v135 = vld [vmem:[%s1 + $0x158] sm:$0xff]
  %v136 = vld [vmem:[%s1 + $0x160] sm:$0xff]
  %v137 = vld [vmem:[%s1 + $0x168] sm:$0xff]
  %v138 = vld [vmem:[%s1 + $0x170] sm:$0xff]
  %v139 = vld [vmem:[%s1 + $0x178] sm:$0xff]
  %140 = vmatprep.subr.mxu0 0.0
  %141 = vmatpush1.msra.mxu0 %v92
  %142 = vmatprep.subr.mxu0 0.0
  %143 = vmatpush1.msra.mxu0 %v93
  %144 = vmatprep.subr.mxu0 0.0
  %145 = vmatpush1.msra.mxu0 %v94
  %146 = vmatprep.subr.mxu0 0.0
  %147 = vmatpush1.msra.mxu0 %v95
  %148 = vmatprep.subr.mxu0 0.0
  %149 = vmatpush1.msra.mxu0 %v96
  %150 = vmatprep.subr.mxu0 0.0
  %151 = vmatpush1.msra.mxu0 %v97
  %152 = vmatprep.subr.mxu0 0.0
  %153 = vmatpush1.msra.mxu0 %v98
  %154 = vmatprep.subr.mxu0 0.0
  %155 = vmatpush1.msra.mxu0 %v99
  %156 = vmatprep.subr.mxu0 0.0
  %157 = vmatpush1.msra.mxu0 %v100
  %158 = vmatprep.subr.mxu0 0.0
  %159 = vmatpush1.msra.mxu0 %v101
  %160 = vmatprep.subr.mxu0 0.0
  %161 = vmatpush1.msra.mxu0 %v102
  %162 = vmatprep.subr.mxu0 0.0
  %163 = vmatpush1.msra.mxu0 %v103
  %164 = vmatprep.subr.mxu0 0.0
  %165 = vmatpush1.msra.mxu0 %v104
  %166 = vmatprep.subr.mxu0 0.0
  %167 = vmatpush1.msra.mxu0 %v105
  %168 = vmatprep.subr.mxu0 0.0
  %169 = vmatpush1.msra.mxu0 %v106
  %170 = vmatprep.subr.mxu0 0.0
  %171 = vmatpush1.msra.mxu0 %v107
  %172 = vmatprep.subr.mxu0 0.0
  %173 = vmatpush1.msra.mxu0 %v108
  %174 = vmatprep.subr.mxu0 0.0
  %175 = vmatpush1.msra.mxu0 %v109
  %176 = vmatprep.subr.mxu0 0.0
  %177 = vmatpush1.msra.mxu0 %v110
  %178 = vmatprep.subr.mxu0 0.0
  %179 = vmatpush1.msra.mxu0 %v111
  %180 = vmatprep.subr.mxu0 0.0
  %181 = vmatpush1.msra.mxu0 %v112
  %182 = vmatprep.subr.mxu0 0.0
  %183 = vmatpush1.msra.mxu0 %v113
  %184 = vmatprep.subr.mxu0 0.0
  %185 = vmatpush1.msra.mxu0 %v114
  %186 = vmatprep.subr.mxu0 0.0
  %187 = vmatpush1.msra.mxu0 %v115
  %188 = vmatprep.subr.mxu0 0.0
  %189 = vmatpush1.msra.mxu0 %v116
  %190 = vmatprep.subr.mxu0 0.0
  %191 = vmatpush1.msra.mxu0 %v117
  %192 = vmatprep.subr.mxu0 0.0
  %193 = vmatpush1.msra.mxu0 %v118
  %194 = vmatprep.subr.mxu0 0.0
  %195 = vmatpush1.msra.mxu0 %v119
  %196 = vmatprep.subr.mxu0 0.0
  %197 = vmatpush1.msra.mxu0 %v120
  %198 = vmatprep.subr.mxu0 0.0
  %199 = vmatpush1.msra.mxu0 %v121
  %200 = vmatprep.subr.mxu0 0.0
  %201 = vmatpush1.msra.mxu0 %v122
  %202 = vmatprep.subr.mxu0 0.0
  %203 = vmatpush1.msra.mxu0 %v123
  %204 = vmatprep.mubr.f32.mxu0 %v81
  %205 = vmatmul.mubr.f32.gmra.mrb[0].mxu0 %v80
  %v206 = vpop.f32.mrb[0].mxu0
  %v207 = vadd.f32 0.0, %v206
  %v208 = vpop.f32.mrb[0].mxu0
  %209 = vmatprep.mubr.f32.mxu0 %v84
  %210 = vmatmul.mubr.f32.gmra.mrb[0].mxu0 %v83
  %v211 = vpop.f32.mrb[0].mxu0
  %v212 = vadd.f32 0.0, %v211
  %v213 = vpop.f32.mrb[0].mxu0
  %214 = vmatprep.mubr.f32.mxu0 %v87
  %215 = vmatmul.mubr.f32.gmra.mrb[0].mxu0 %v86
  %v216 = vpop.f32.mrb[0].mxu0
  %v217 = vadd.f32 0.0, %v216
  %v218 = vpop.f32.mrb[0].mxu0
  %219 = vmatprep.mubr.f32.mxu0 %v90
  %220 = vmatmul.mubr.f32.gmra.mrb[0].mxu0 %v89
  %v221 = vpop.f32.mrb[0].mxu0
  %v222 = vadd.f32 0.0, %v221
  %v223 = vpop.f32.mrb[0].mxu0
  %224 = vdwg.mxu0
  %225 = vmatprep.subr.mxu0 0.0
  %226 = vmatpush1.msra.mxu0 %v124
  %227 = vmatprep.subr.mxu0 0.0
  %228 = vmatpush1.msra.mxu0 %v125
  %229 = vmatprep.subr.mxu0 0.0
  %230 = vmatpush1.msra.mxu0 %v126
  %231 = vmatprep.subr.mxu0 0.0
  %232 = vmatpush1.msra.mxu0 %v127
  %233 = vmatprep.subr.mxu0 0.0
  %234 = vmatpush1.msra.mxu0 %v128
  %235 = vmatprep.subr.mxu0 0.0
  %236 = vmatpush1.msra.mxu0 %v129
  %237 = vmatprep.subr.mxu0 0.0
  %238 = vmatpush1.msra.mxu0 %v130
  %239 = vmatprep.subr.mxu0 0.0
  %240 = vmatpush1.msra.mxu0 %v131
  %241 = vmatprep.subr.mxu0 0.0
  %242 = vmatpush1.msra.mxu0 %v132
  %243 = vmatprep.subr.mxu0 0.0
  %244 = vmatpush1.msra.mxu0 %v133
  %245 = vmatprep.subr.mxu0 0.0
  %246 = vmatpush1.msra.mxu0 %v134
  %247 = vmatprep.subr.mxu0 0.0
  %248 = vmatpush1.msra.mxu0 %v135
  %249 = vmatprep.subr.mxu0 0.0
  %250 = vmatpush1.msra.mxu0 %v136
  %251 = vmatprep.subr.mxu0 0.0
  %252 = vmatpush1.msra.mxu0 %v137
  %253 = vmatprep.subr.mxu0 0.0
  %254 = vmatpush1.msra.mxu0 %v138
  %255 = vmatprep.subr.mxu0 0.0
  %256 = vmatpush1.msra.mxu0 %v139
  %257 = vmatprep.subr.mxu0 0.0
  %258 = vmatpush1.msra.mxu0 0.0
  %259 = vmatprep.subr.mxu0 0.0
  %260 = vmatpush1.msra.mxu0 0.0
  %261 = vmatprep.subr.mxu0 0.0
  %262 = vmatpush1.msra.mxu0 0.0
  %263 = vmatprep.subr.mxu0 0.0
  %264 = vmatpush1.msra.mxu0 0.0
  %265 = vmatprep.subr.mxu0 0.0
  %266 = vmatpush1.msra.mxu0 0.0
  %267 = vmatprep.subr.mxu0 0.0
  %268 = vmatpush1.msra.mxu0 0.0
  %269 = vmatprep.subr.mxu0 0.0
  %270 = vmatpush1.msra.mxu0 0.0
  %271 = vmatprep.subr.mxu0 0.0
  %272 = vmatpush1.msra.mxu0 0.0
  %273 = vmatprep.subr.mxu0 0.0
  %274 = vmatpush1.msra.mxu0 0.0
  %275 = vmatprep.subr.mxu0 0.0
  %276 = vmatpush1.msra.mxu0 0.0
  %277 = vmatprep.subr.mxu0 0.0
  %278 = vmatpush1.msra.mxu0 0.0
  %279 = vmatprep.subr.mxu0 0.0
  %280 = vmatpush1.msra.mxu0 0.0
  %281 = vmatprep.subr.mxu0 0.0
  %282 = vmatpush1.msra.mxu0 0.0
  %283 = vmatprep.subr.mxu0 0.0
  %284 = vmatpush1.msra.mxu0 0.0
  %285 = vmatprep.subr.mxu0 0.0
  %286 = vmatpush1.msra.mxu0 0.0
  %287 = vmatprep.subr.mxu0 0.0
  %288 = vmatpush1.msra.mxu0 0.0
  %289 = vmatprep.mubr.f32.mxu0 0.0
  %290 = vmatmul.mubr.f32.gmra.mrb[0].mxu0 %v82
  %v291 = vpop.f32.mrb[0].mxu0
  %v292 = vadd.f32 %v207, %v291
  %v293 = vpop.f32.mrb[0].mxu0
  %294 = vmatprep.mubr.f32.mxu0 0.0
  %295 = vmatmul.mubr.f32.gmra.mrb[0].mxu0 %v85
  %v296 = vpop.f32.mrb[0].mxu0
  %v297 = vadd.f32 %v212, %v296
  %v298 = vpop.f32.mrb[0].mxu0
  %299 = vmatprep.mubr.f32.mxu0 0.0
  %300 = vmatmul.mubr.f32.gmra.mrb[0].mxu0 %v88
  %v301 = vpop.f32.mrb[0].mxu0
  %v302 = vadd.f32 %v217, %v301
  %v303 = vpop.f32.mrb[0].mxu0
  %304 = vmatprep.mubr.f32.mxu0 0.0
  %305 = vmatmul.mubr.f32.gmra.mrb[0].mxu0 %v91
  %v306 = vpop.f32.mrb[0].mxu0
  %v307 = vadd.f32 %v222, %v306
  %v308 = vpop.f32.mrb[0].mxu0
  %309 = vdwg.mxu0
  %v310 = vadd.f32 %v292, %v297
  %v311 = vadd.f32 %v310, %v302
  %v312 = vadd.f32 %v311, %v307
  %v313 = vrot.slane %v312, 4
  %v314 = vadd.f32 %v312, %v313
  %v315 = vrot.slane %v314, 2
  %v316 = vadd.f32 %v314, %v315
  %v317 = vrot.slane %v316, 1
  %v318 = vadd.f32 %v316, %v317
  %v319 = vmul.f32 %v292, %v292
  %v320 = vmul.f32 %v297, %v297
  %v321 = vmul.f32 %v302, %v302
  %v322 = vmul.f32 %v307, %v307
  %v323 = vadd.f32 %v319, %v320
  %v324 = vadd.f32 %v323, %v321
  %v325 = vadd.f32 %v324, %v322
  %v326 = vrot.slane %v325, 4
  %v327 = vadd.f32 %v325, %v326
  %v328 = vrot.slane %v327, 2
  %v329 = vadd.f32 %v327, %v328
  %v330 = vrot.slane %v329, 1
  %v331 = vadd.f32 %v329, %v330
  %v332 = vsel %vm48, %v318, %v331
  %333 = vrot.lane.b32.xlu0 %v332, 8
  %v334 = vpop.permute.xlu0 %333
  %v335 = vadd.f32 %v332, %v334
  %336 = vrot.lane.b32.xlu0 %v335, 16
  %v337 = vpop.permute.xlu0 %336
  %v338 = vadd.f32 %v335, %v337
  %339 = vrot.lane.b32.xlu0 %v338, 32
  %v340 = vpop.permute.xlu0 %339
  %v341 = vadd.f32 %v338, %v340
  %342 = vrot.lane.b32.xlu0 %v341, 64
  %v343 = vpop.permute.xlu0 %342
  %v344 = vadd.f32 %v341, %v343
  %v345 = vmul.f32 %v344, 0.001953125
  %v346 = vmul.f32 %v345, %v345
  %v348 = vrot.slane %v346, 7
  %v350 = vsub.f32 %v345, %v348
  %v351 = vmax.f32 %v350, 0.0
  %v352 = vld [vmem:[%s3] sm:$0x1]
  %v353 = vadd.f32 %v351, 1e-05
  %v354 = vrsqrt.pop %v353
  %v357 = vunpack.c.l.s4 1966171168
  %v358 = vunpack.c.0.s8 %v357
  %v359 = vlaneseq
  %v360 = vshrl.u32 %v359, 7
  %v361 = vsub.s32 %v358, %v360
  %v362 = vrot.slane %v354, %v361
  %v363 = vcombine.high %v362, %v362
  %v365 = vunpack.c.l.s4 1966171168
  %v366 = vunpack.c.0.s8 %v365
  %v367 = vlaneseq
  %v368 = vshrl.u32 %v367, 7
  %v369 = vsub.s32 %v366, %v368
  %v370 = vrot.slane %v363, %v369
  %v372 = vmul.f32 %v352, %v370
  %v373 = vld [vmem:[%s4] sm:$0x1]
  %v374 = vmul.f32 %v345, %v372
  %v375 = vsub.f32 %v373, %v374
  %v377 = vlaneseq
  %v378 = vshrl.u32 %v377, 7
  %v379 = vsub.s32 0, %v378
  %v380 = vrot.slane %v372, %v379
  %v382 = vmul.f32 %v292, %v380
  %v383 = vmul.f32 %v297, %v380
  %v384 = vmul.f32 %v302, %v380
  %v385 = vmul.f32 %v307, %v380
  %v387 = vlaneseq
  %v388 = vshrl.u32 %v387, 7
  %v389 = vsub.s32 0, %v388
  %v390 = vrot.slane %v375, %v389
  %v392 = vadd.f32 %v382, %v390
  %v393 = vadd.f32 %v383, %v390
  %v394 = vadd.f32 %v384, %v390
  %v395 = vadd.f32 %v385, %v390
  %v396 = vmax.f32 %v392, 0.0
  %v397 = vmax.f32 %v393, 0.0
  %v398 = vmax.f32 %v394, 0.0
  %v399 = vmax.f32 %v395, 0.0
  %400 = vst [vmem:[#allocation2 + $0x8] sm:$0xff] %v396
  %401 = vst [vmem:[#allocation2 + $0x20] sm:$0xff] %v397
  %402 = vst [vmem:[#allocation2 + $0x38] sm:$0xff] %v398
  %403 = vst [vmem:[#allocation2 + $0x50] sm:$0xff] %v399
  %v406 = vrot.slane %v396, 7
  %v407 = vrot.slane %v397, 7
  %v408 = vsel %vm48, %v406, %v407
  %411 = vst [vmem:[#allocation2] sm:$0xfe] %v406
  %412 = vst [vmem:[#allocation2 + $0x18] sm:$0xff] %v408
  %v413 = vrot.slane %v396, 1
  %v414 = vrot.slane %v397, 1
  %v415 = vsel %vm56, %v413, %v414
  %418 = vst [vmem:[#allocation2 + $0x10] sm:$0xff] %v415
  %419 = vst [vmem:[#allocation2 + $0x28] sm:$0x7f] %v414
  %v422 = vrot.slane %v398, 7
  %v423 = vrot.slane %v399, 7
  %v424 = vsel %vm48, %v422, %v423
  %427 = vst [vmem:[#allocation2 + $0x30] sm:$0xfe] %v422
  %428 = vst [vmem:[#allocation2 + $0x48] sm:$0xff] %v424
  %v429 = vrot.slane %v398, 1
  %v430 = vrot.slane %v399, 1
  %v431 = vsel %vm56, %v429, %v430
  %434 = vst [vmem:[#allocation2 + $0x40] sm:$0xff] %v431
  %435 = vst [vmem:[#allocation2 + $0x58] sm:$0x7f] %v430
  %v436 = vld [vmem:[#allocation2] sm:$0xff]
  %v437 = vld [vmem:[#allocation2 + $0x8] sm:$0xff]
  %v438 = vld [vmem:[#allocation2 + $0x10] sm:$0xff]
  %v439 = vld [vmem:[#allocation2 + $0x18] sm:$0xff]
  %v440 = vld [vmem:[#allocation2 + $0x20] sm:$0xff]
  %v441 = vld [vmem:[#allocation2 + $0x28] sm:$0xff]
  %v442 = vld [vmem:[#allocation2 + $0x30] sm:$0xff]
  %v443 = vld [vmem:[#allocation2 + $0x38] sm:$0xff]
  %v444 = vld [vmem:[#allocation2 + $0x40] sm:$0xff]
  %v445 = vld [vmem:[#allocation2 + $0x48] sm:$0xff]
  %v446 = vld [vmem:[#allocation2 + $0x50] sm:$0xff]
  %v447 = vld [vmem:[#allocation2 + $0x58] sm:$0xff]
  %v448 = vld [vmem:[%s2] sm:$0xff]
  %v449 = vld [vmem:[%s2 + $0x8] sm:$0xff]
  %v450 = vld [vmem:[%s2 + $0x10] sm:$0xff]
  %v451 = vld [vmem:[%s2 + $0x18] sm:$0xff]
  %v452 = vld [vmem:[%s2 + $0x20] sm:$0xff]
  %v453 = vld [vmem:[%s2 + $0x28] sm:$0xff]
  %v454 = vld [vmem:[%s2 + $0x30] sm:$0xff]
  %v455 = vld [vmem:[%s2 + $0x38] sm:$0xff]
  %v456 = vld [vmem:[%s2 + $0x40] sm:$0xff]
  %v457 = vld [vmem:[%s2 + $0x48] sm:$0xff]
  %v458 = vld [vmem:[%s2 + $0x50] sm:$0xff]
  %v459 = vld [vmem:[%s2 + $0x58] sm:$0xff]
  %v460 = vld [vmem:[%s2 + $0x60] sm:$0xff]
  %v461 = vld [vmem:[%s2 + $0x68] sm:$0xff]
  %v462 = vld [vmem:[%s2 + $0x70] sm:$0xff]
  %v463 = vld [vmem:[%s2 + $0x78] sm:$0xff]
  %v464 = vld [vmem:[%s2 + $0x80] sm:$0xff]
  %v465 = vld [vmem:[%s2 + $0x88] sm:$0xff]
  %v466 = vld [vmem:[%s2 + $0x90] sm:$0xff]
  %v467 = vld [vmem:[%s2 + $0x98] sm:$0xff]
  %v468 = vld [vmem:[%s2 + $0xa0] sm:$0xff]
  %v469 = vld [vmem:[%s2 + $0xa8] sm:$0xff]
  %v470 = vld [vmem:[%s2 + $0xb0] sm:$0xff]
  %v471 = vld [vmem:[%s2 + $0xb8] sm:$0xff]
  %v472 = vld [vmem:[%s2 + $0xc0] sm:$0xff]
  %v473 = vld [vmem:[%s2 + $0xc8] sm:$0xff]
  %v474 = vld [vmem:[%s2 + $0xd0] sm:$0xff]
  %v475 = vld [vmem:[%s2 + $0xd8] sm:$0xff]
  %v476 = vld [vmem:[%s2 + $0xe0] sm:$0xff]
  %v477 = vld [vmem:[%s2 + $0xe8] sm:$0xff]
  %v478 = vld [vmem:[%s2 + $0xf0] sm:$0xff]
  %v479 = vld [vmem:[%s2 + $0xf8] sm:$0xff]
  %v480 = vld [vmem:[%s2 + $0x100] sm:$0xff]
  %v481 = vld [vmem:[%s2 + $0x108] sm:$0xff]
  %v482 = vld [vmem:[%s2 + $0x110] sm:$0xff]
  %v483 = vld [vmem:[%s2 + $0x118] sm:$0xff]
  %v484 = vld [vmem:[%s2 + $0x120] sm:$0xff]
  %v485 = vld [vmem:[%s2 + $0x128] sm:$0xff]
  %v486 = vld [vmem:[%s2 + $0x130] sm:$0xff]
  %v487 = vld [vmem:[%s2 + $0x138] sm:$0xff]
  %v488 = vld [vmem:[%s2 + $0x140] sm:$0xff]
  %v489 = vld [vmem:[%s2 + $0x148] sm:$0xff]
  %v490 = vld [vmem:[%s2 + $0x150] sm:$0xff]
  %v491 = vld [vmem:[%s2 + $0x158] sm:$0xff]
  %v492 = vld [vmem:[%s2 + $0x160] sm:$0xff]
  %v493 = vld [vmem:[%s2 + $0x168] sm:$0xff]
  %v494 = vld [vmem:[%s2 + $0x170] sm:$0xff]
  %v495 = vld [vmem:[%s2 + $0x178] sm:$0xff]
  %496 = vmatprep.subr.mxu0 0.0
  %497 = vmatpush1.msra.mxu0 %v448
  %498 = vmatprep.subr.mxu0 0.0
  %499 = vmatpush1.msra.mxu0 %v449
  %500 = vmatprep.subr.mxu0 0.0
  %501 = vmatpush1.msra.mxu0 %v450
  %502 = vmatprep.subr.mxu0 0.0
  %503 = vmatpush1.msra.mxu0 %v451
  %504 = vmatprep.subr.mxu0 0.0
  %505 = vmatpush1.msra.mxu0 %v452
  %506 = vmatprep.subr.mxu0 0.0
  %507 = vmatpush1.msra.mxu0 %v453
  %508 = vmatprep.subr.mxu0 0.0
  %509 = vmatpush1.msra.mxu0 %v454
  %510 = vmatprep.subr.mxu0 0.0
  %511 = vmatpush1.msra.mxu0 %v455
  %512 = vmatprep.subr.mxu0 0.0
  %513 = vmatpush1.msra.mxu0 %v456
  %514 = vmatprep.subr.mxu0 0.0
  %515 = vmatpush1.msra.mxu0 %v457
  %516 = vmatprep.subr.mxu0 0.0
  %517 = vmatpush1.msra.mxu0 %v458
  %518 = vmatprep.subr.mxu0 0.0
  %519 = vmatpush1.msra.mxu0 %v459
  %520 = vmatprep.subr.mxu0 0.0
  %521 = vmatpush1.msra.mxu0 %v460
  %522 = vmatprep.subr.mxu0 0.0
  %523 = vmatpush1.msra.mxu0 %v461
  %524 = vmatprep.subr.mxu0 0.0
  %525 = vmatpush1.msra.mxu0 %v462
  %526 = vmatprep.subr.mxu0 0.0
  %527 = vmatpush1.msra.mxu0 %v463
  %528 = vmatprep.subr.mxu0 0.0
  %529 = vmatpush1.msra.mxu0 %v464
  %530 = vmatprep.subr.mxu0 0.0
  %531 = vmatpush1.msra.mxu0 %v465
  %532 = vmatprep.subr.mxu0 0.0
  %533 = vmatpush1.msra.mxu0 %v466
  %534 = vmatprep.subr.mxu0 0.0
  %535 = vmatpush1.msra.mxu0 %v467
  %536 = vmatprep.subr.mxu0 0.0
  %537 = vmatpush1.msra.mxu0 %v468
  %538 = vmatprep.subr.mxu0 0.0
  %539 = vmatpush1.msra.mxu0 %v469
  %540 = vmatprep.subr.mxu0 0.0
  %541 = vmatpush1.msra.mxu0 %v470
  %542 = vmatprep.subr.mxu0 0.0
  %543 = vmatpush1.msra.mxu0 %v471
  %544 = vmatprep.subr.mxu0 0.0
  %545 = vmatpush1.msra.mxu0 %v472
  %546 = vmatprep.subr.mxu0 0.0
  %547 = vmatpush1.msra.mxu0 %v473
  %548 = vmatprep.subr.mxu0 0.0
  %549 = vmatpush1.msra.mxu0 %v474
  %550 = vmatprep.subr.mxu0 0.0
  %551 = vmatpush1.msra.mxu0 %v475
  %552 = vmatprep.subr.mxu0 0.0
  %553 = vmatpush1.msra.mxu0 %v476
  %554 = vmatprep.subr.mxu0 0.0
  %555 = vmatpush1.msra.mxu0 %v477
  %556 = vmatprep.subr.mxu0 0.0
  %557 = vmatpush1.msra.mxu0 %v478
  %558 = vmatprep.subr.mxu0 0.0
  %559 = vmatpush1.msra.mxu0 %v479
  %560 = vmatprep.mubr.f32.mxu0 %v437
  %561 = vmatmul.mubr.f32.gmra.mrb[0].mxu0 %v436
  %v562 = vpop.f32.mrb[0].mxu0
  %v563 = vadd.f32 0.0, %v562
  %v564 = vpop.f32.mrb[0].mxu0
  %565 = vmatprep.mubr.f32.mxu0 %v440
  %566 = vmatmul.mubr.f32.gmra.mrb[0].mxu0 %v439
  %v567 = vpop.f32.mrb[0].mxu0
  %v568 = vadd.f32 0.0, %v567
  %v569 = vpop.f32.mrb[0].mxu0
  %570 = vmatprep.mubr.f32.mxu0 %v443
  %571 = vmatmul.mubr.f32.gmra.mrb[0].mxu0 %v442
  %v572 = vpop.f32.mrb[0].mxu0
  %v573 = vadd.f32 0.0, %v572
  %v574 = vpop.f32.mrb[0].mxu0
  %575 = vmatprep.mubr.f32.mxu0 %v446
  %576 = vmatmul.mubr.f32.gmra.mrb[0].mxu0 %v445
  %v577 = vpop.f32.mrb[0].mxu0
  %v578 = vadd.f32 0.0, %v577
  %v579 = vpop.f32.mrb[0].mxu0
  %580 = vdwg.mxu0
  %581 = vmatprep.subr.mxu0 0.0
  %582 = vmatpush1.msra.mxu0 %v480
  %583 = vmatprep.subr.mxu0 0.0
  %584 = vmatpush1.msra.mxu0 %v481
  %585 = vmatprep.subr.mxu0 0.0
  %586 = vmatpush1.msra.mxu0 %v482
  %587 = vmatprep.subr.mxu0 0.0
  %588 = vmatpush1.msra.mxu0 %v483
  %589 = vmatprep.subr.mxu0 0.0
  %590 = vmatpush1.msra.mxu0 %v484
  %591 = vmatprep.subr.mxu0 0.0
  %592 = vmatpush1.msra.mxu0 %v485
  %593 = vmatprep.subr.mxu0 0.0
  %594 = vmatpush1.msra.mxu0 %v486
  %595 = vmatprep.subr.mxu0 0.0
  %596 = vmatpush1.msra.mxu0 %v487
  %597 = vmatprep.subr.mxu0 0.0
  %598 = vmatpush1.msra.mxu0 %v488
  %599 = vmatprep.subr.mxu0 0.0
  %600 = vmatpush1.msra.mxu0 %v489
  %601 = vmatprep.subr.mxu0 0.0
  %602 = vmatpush1.msra.mxu0 %v490
  %603 = vmatprep.subr.mxu0 0.0
  %604 = vmatpush1.msra.mxu0 %v491
  %605 = vmatprep.subr.mxu0 0.0
  %606 = vmatpush1.msra.mxu0 %v492
  %607 = vmatprep.subr.mxu0 0.0
  %608 = vmatpush1.msra.mxu0 %v493
  %609 = vmatprep.subr.mxu0 0.0
  %610 = vmatpush1.msra.mxu0 %v494
  %611 = vmatprep.subr.mxu0 0.0
  %612 = vmatpush1.msra.mxu0 %v495
  %613 = vmatprep.subr.mxu0 0.0
  %614 = vmatpush1.msra.mxu0 0.0
  %615 = vmatprep.subr.mxu0 0.0
  %616 = vmatpush1.msra.mxu0 0.0
  %617 = vmatprep.subr.mxu0 0.0
  %618 = vmatpush1.msra.mxu0 0.0
  %619 = vmatprep.subr.mxu0 0.0
  %620 = vmatpush1.msra.mxu0 0.0
  %621 = vmatprep.subr.mxu0 0.0
  %622 = vmatpush1.msra.mxu0 0.0
  %623 = vmatprep.subr.mxu0 0.0
  %624 = vmatpush1.msra.mxu0 0.0
  %625 = vmatprep.subr.mxu0 0.0
  %626 = vmatpush1.msra.mxu0 0.0
  %627 = vmatprep.subr.mxu0 0.0
  %628 = vmatpush1.msra.mxu0 0.0
  %629 = vmatprep.subr.mxu0 0.0
  %630 = vmatpush1.msra.mxu0 0.0
  %631 = vmatprep.subr.mxu0 0.0
  %632 = vmatpush1.msra.mxu0 0.0
  %633 = vmatprep.subr.mxu0 0.0
  %634 = vmatpush1.msra.mxu0 0.0
  %635 = vmatprep.subr.mxu0 0.0
  %636 = vmatpush1.msra.mxu0 0.0
  %637 = vmatprep.subr.mxu0 0.0
  %638 = vmatpush1.msra.mxu0 0.0
  %639 = vmatprep.subr.mxu0 0.0
  %640 = vmatpush1.msra.mxu0 0.0
  %641 = vmatprep.subr.mxu0 0.0
  %642 = vmatpush1.msra.mxu0 0.0
  %643 = vmatprep.subr.mxu0 0.0
  %644 = vmatpush1.msra.mxu0 0.0
  %645 = vmatprep.mubr.f32.mxu0 0.0
  %646 = vmatmul.mubr.f32.gmra.mrb[0].mxu0 %v438
  %v647 = vpop.f32.mrb[0].mxu0
  %v648 = vadd.f32 %v563, %v647
  %v649 = vpop.f32.mrb[0].mxu0
  %650 = vmatprep.mubr.f32.mxu0 0.0
  %651 = vmatmul.mubr.f32.gmra.mrb[0].mxu0 %v441
  %v652 = vpop.f32.mrb[0].mxu0
  %v653 = vadd.f32 %v568, %v652
  %v654 = vpop.f32.mrb[0].mxu0
  %655 = vmatprep.mubr.f32.mxu0 0.0
  %656 = vmatmul.mubr.f32.gmra.mrb[0].mxu0 %v444
  %v657 = vpop.f32.mrb[0].mxu0
  %v658 = vadd.f32 %v573, %v657
  %v659 = vpop.f32.mrb[0].mxu0
  %660 = vmatprep.mubr.f32.mxu0 0.0
  %661 = vmatmul.mubr.f32.gmra.mrb[0].mxu0 %v447
  %v662 = vpop.f32.mrb[0].mxu0
  %v663 = vadd.f32 %v578, %v662
  %v664 = vpop.f32.mrb[0].mxu0
  %665 = vdwg.mxu0
  %v666 = vadd.f32 %v648, %v653
  %v667 = vadd.f32 %v666, %v658
  %v668 = vadd.f32 %v667, %v663
  %v669 = vrot.slane %v668, 4
  %v670 = vadd.f32 %v668, %v669
  %v671 = vrot.slane %v670, 2
  %v672 = vadd.f32 %v670, %v671
  %v673 = vrot.slane %v672, 1
  %v674 = vadd.f32 %v672, %v673
  %v675 = vmul.f32 %v648, %v648
  %v676 = vmul.f32 %v653, %v653
  %v677 = vmul.f32 %v658, %v658
  %v678 = vmul.f32 %v663, %v663
  %v679 = vadd.f32 %v675, %v676
  %v680 = vadd.f32 %v679, %v677
  %v681 = vadd.f32 %v680, %v678
  %v682 = vrot.slane %v681, 4
  %v683 = vadd.f32 %v681, %v682
  %v684 = vrot.slane %v683, 2
  %v685 = vadd.f32 %v683, %v684
  %v686 = vrot.slane %v685, 1
  %v687 = vadd.f32 %v685, %v686
  %v688 = vsel %vm48, %v674, %v687
  %689 = vrot.lane.b32.xlu0 %v688, 8
  %v690 = vpop.permute.xlu0 %689
  %v691 = vadd.f32 %v688, %v690
  %692 = vrot.lane.b32.xlu0 %v691, 16
  %v693 = vpop.permute.xlu0 %692
  %v694 = vadd.f32 %v691, %v693
  %695 = vrot.lane.b32.xlu0 %v694, 32
  %v696 = vpop.permute.xlu0 %695
  %v697 = vadd.f32 %v694, %v696
  %698 = vrot.lane.b32.xlu0 %v697, 64
  %v699 = vpop.permute.xlu0 %698
  %v700 = vadd.f32 %v697, %v699
  %v701 = vmul.f32 %v700, 0.001953125
  %v702 = vmul.f32 %v701, %v701
  %v704 = vrot.slane %v702, 7
  %v706 = vsub.f32 %v701, %v704
  %v707 = vmax.f32 %v706, 0.0
  %v708 = vld [vmem:[%s5] sm:$0x1]
  %v709 = vadd.f32 %v707, 1e-05
  %v710 = vrsqrt.pop %v709
  %v713 = vunpack.c.l.s4 1966171168
  %v714 = vunpack.c.0.s8 %v713
  %v715 = vlaneseq
  %v716 = vshrl.u32 %v715, 7
  %v717 = vsub.s32 %v714, %v716
  %v718 = vrot.slane %v710, %v717
  %v719 = vcombine.high %v718, %v718
  %v721 = vunpack.c.l.s4 1966171168
  %v722 = vunpack.c.0.s8 %v721
  %v723 = vlaneseq
  %v724 = vshrl.u32 %v723, 7
  %v725 = vsub.s32 %v722, %v724
  %v726 = vrot.slane %v719, %v725
  %v728 = vmul.f32 %v708, %v726
  %v729 = vld [vmem:[%s6] sm:$0x1]
  %v730 = vmul.f32 %v701, %v728
  %v731 = vsub.f32 %v729, %v730
  %v733 = vlaneseq
  %v734 = vshrl.u32 %v733, 7
  %v735 = vsub.s32 0, %v734
  %v736 = vrot.slane %v728, %v735
  %v738 = vmul.f32 %v648, %v736
  %v739 = vmul.f32 %v653, %v736
  %v740 = vmul.f32 %v658, %v736
  %v741 = vmul.f32 %v663, %v736
  %v743 = vlaneseq
  %v744 = vshrl.u32 %v743, 7
  %v745 = vsub.s32 0, %v744
  %v746 = vrot.slane %v731, %v745
  %v748 = vadd.f32 %v738, %v746
  %v749 = vadd.f32 %v739, %v746
  %v750 = vadd.f32 %v740, %v746
  %v751 = vadd.f32 %v741, %v746
  %v752 = vld [vmem:[%s0] sm:$0xff]
  %v753 = vld [vmem:[%s0 + $0x8] sm:$0xff]
  %v754 = vld [vmem:[%s0 + $0x10] sm:$0xff]
  %v755 = vld [vmem:[%s0 + $0x18] sm:$0xff]
  %v756 = vadd.f32 %v748, %v752
  %v757 = vadd.f32 %v749, %v753
  %v758 = vadd.f32 %v750, %v754
  %v759 = vadd.f32 %v751, %v755
  %v760 = vmax.f32 %v756, 0.0
  %v761 = vmax.f32 %v757, 0.0
  %v762 = vmax.f32 %v758, 0.0
  %v763 = vmax.f32 %v759, 0.0
  %764 = vst [vmem:[%s7] sm:$0xff] %v760
  %765 = vst [vmem:[%s7 + $0x8] sm:$0xff] %v761
  %766 = vst [vmem:[%s7 + $0x10] sm:$0xff] %v762
  %767 = vst [vmem:[%s7 + $0x18] sm:$0xff] %v763
  // Predicated region
  $region30: #{building_block.1} parent=0 // pred_check
    _
  $region31: #{building_block.1} parent=0 // pred_check_branch
    %769 = sbr.rel (0) target = $region33
  $region32: #{building_block.1} parent=0 // pred_region
    _
  $region33: #{building_block.1} parent=0 // pred_fallthru
    _
  // Predicated region
  $region34: #{building_block.1} parent=0 // pred_check
    _
  $region35: #{building_block.1} parent=0 // pred_check_branch
    %771 = sbr.rel (0) target = $region37
  $region36: #{building_block.1} parent=0 // pred_region
    _
  $region37: #{building_block.1} parent=0 // pred_fallthru
    _

</llo_original>
